<compile_context>
chip_gen: v7x
topology: tpu7x:2x2x1
jax: 0.10.0
libtpu: 0.0.40
codegen_flags: <defaults>
</compile_context>

<pallas_src>
import jax
import jax.numpy as jnp
from jax.experimental import pallas as pl
from jax.experimental.pallas import tpu as pltpu

MAX_CHAR_LEN = 15
KSIZE = 5
PAD = 2
MASK_FILL = -1e30  # finite fill: an all-masked row softmaxes to uniform, not NaN


# ----------------------------------------------------------------------------
# Fused kernel: char CNN + proj + self-attention + fc + argmax  (Bt sequences / step)
# ----------------------------------------------------------------------------
def bis4crf_kernel(ids_ref, word_ref, char_ref,
                   wconv_ref, bcnn_ref, wpw_ref, wpc_ref,
                   wq_ref, wk_ref, wv_ref, wfc_ref, bfc_ref,
                   pred_ref):
    f32 = jnp.float32
    cdt = jnp.bfloat16                       # MXU-input dtype; accumulation stays f32

    Bt, S = ids_ref.shape                    # (Bt, S) int32 ids (mask source)
    H = wpw_ref.shape[-1]
    L = wfc_ref.shape[-1]
    C = bcnn_ref.shape[-1]
    rows = Bt * S

    # ---- char CNN: one dense matmul against the banded conv weight ----
    # wconv encodes the 5-tap kernel and the (2,0) zero padding, so no im2col / shifts.
    conv = jnp.dot(char_ref[...], wconv_ref[...],
                   preferred_element_type=f32)               # (rows, Lc*C) f32
    feat = conv[:, 0:C]                                      # max over char positions
    for l in range(1, MAX_CHAR_LEN):                         # 14 VPU maxima on lane slices
        feat = jnp.maximum(feat, conv[:, l * C:(l + 1) * C])
    feat = feat + bcnn_ref[...]                              # bias is const over L -> after max

    # TODO(synk): ssm_in (S4Block) unavailable -> identity on the features.

    # ---- proj_ssm, split across the (word || char) feature seam (no concat) ----
    h = (jnp.dot(word_ref[...], wpw_ref[...], preferred_element_type=f32) +
         jnp.dot(feat.astype(cdt), wpc_ref[...], preferred_element_type=f32))   # (rows, H)

    # ---- self-attention: three lane-aligned matmuls; 1/sqrt(H) pre-folded into wq ----
    hb = h.astype(cdt)
    q = jnp.dot(hb, wq_ref[...], preferred_element_type=f32).reshape(Bt, S, H)
    k = jnp.dot(hb, wk_ref[...], preferred_element_type=f32).reshape(Bt, S, H)
    v = jnp.dot(hb, wv_ref[...], preferred_element_type=f32).reshape(Bt, S, H)

    att = jnp.einsum('bqh,bkh->bqk', q.astype(cdt), k.astype(cdt),
                     preferred_element_type=f32)             # (Bt, S, S)
    mask = ids_ref[...] != 0                                 # (Bt, S): valid keys
    att = jnp.where(mask[:, None, :], att, MASK_FILL)        # masked_fill over keys
    att = att - jnp.max(att, axis=-1, keepdims=True)
    p = jnp.exp(att)
    p = p * pl.reciprocal(jnp.sum(p, axis=-1, keepdims=True), approx=True)
    ctx = jnp.einsum('bqk,bkh->bqh', p.astype(cdt), v.astype(cdt),
                     preferred_element_type=f32)             # (Bt, S, H)

    # TODO(synk): ssm_mid / ssm_out (S4Block) -> identity.

    # ---- fc + argmax (first-max tie-break, matches torch.argmax) ----
    logits = (jnp.dot(ctx.reshape(rows, H).astype(cdt), wfc_ref[...],
                      preferred_element_type=f32) + bfc_ref[...])               # (rows, L)
    logits = logits.reshape(Bt, S, L)
    mx = jnp.max(logits, axis=-1, keepdims=True)
    lbl = jax.lax.broadcasted_iota(jnp.int32, logits.shape, 2).astype(f32)
    cand = jnp.where(logits == mx, lbl, float(L))
    pred_ref[...] = jnp.min(cand, axis=-1).astype(jnp.int32)                    # (Bt, S)


# ----------------------------------------------------------------------------
# Batch-tile picker: fat MXU rows per step, but keep >= 2 grid steps (v7x megacore)
# ----------------------------------------------------------------------------
def _pick_batch_tile(B, S):
    cap = max(1, 512 // max(S, 1))           # ~512 rows per step is plenty at these dims
    bt = min(max(B // 2, 1), cap)            # B//2 keeps at least 2 grid steps for B >= 2
    while B % bt:
        bt -= 1
    return bt


# ----------------------------------------------------------------------------
# Wrapper: embedding gathers + one-time weight layout prep in XLA, fused kernel
# ----------------------------------------------------------------------------
def bis4crf_forward(params, input_ids, char_input_ids):
    B, S = input_ids.shape
    E = params['word_emb'].shape[1]
    C = params['char_emb'].shape[1]
    H = params['q_w'].shape[1]
    L = params['fc_w'].shape[1]
    Lc = MAX_CHAR_LEN
    cdt = jnp.bfloat16

    Bt = _pick_batch_tile(B, S)
    G = B // Bt
    rows = Bt * S

    # embedding gathers stay in XLA (data-dependent gather, no rectangular-tile DMA);
    # activations shipped to the kernel in bf16 (halves the dominant DMA traffic)
    word_embs = jnp.take(params['word_emb'], input_ids, axis=0).astype(cdt)
    char_embs = jnp.take(params['char_emb'], char_input_ids, axis=0).astype(cdt)
    word_embs = word_embs.reshape(G, rows, E)                # lane-dense (rows, E)
    char_embs = char_embs.reshape(G, rows, Lc * C)           # lane-dense (rows, 120)
    ids = input_ids.astype(jnp.int32).reshape(G, Bt, S)      # key-mask source

    # --- one-time weight layout prep (folded under jit) ---
    # Banded conv weight: A[p*C+c, l*C+o] = W[k, c, o] with k = p - l + PAD (valid taps only),
    # so   conv_flat = char_flat @ A   reproduces Conv2d((5,C), padding=(2,0)) incl. padding.
    wconv = sum(
        jnp.einsum('pm,co->pcmo',
                   jnp.eye(Lc, dtype=jnp.float32, k=-(k - PAD)),
                   params['cnn_w'][k]).reshape(Lc * C, Lc * C)
        for k in range(KSIZE)).astype(cdt)
    wpw = params['proj_w_word'].astype(cdt)                  # (E, H)
    wpc = params['proj_w_char'].astype(cdt)                  # (C, H)
    wq = (params['q_w'] * (1.0 / float(H) ** 0.5)).astype(cdt)   # scale folded into q
    wk = params['k_w'].astype(cdt)
    wv = params['v_w'].astype(cdt)
    wfc = params['fc_w'].astype(cdt)

    def full2d(a):
        r, c = a.shape
        return pl.BlockSpec((r, c), lambda g: (0, 0))

    per_row_flops = 2 * (Lc * C * Lc * C + E * H + C * H + 3 * H * H + H * L)
    flops = B * S * per_row_flops + 4 * B * S * S * H
    bytes_accessed = (2 * B * S * (E + Lc * C) + 4 * B * S * 2
                      + 2 * (Lc * C * Lc * C + E * H + C * H + 3 * H * H + H * L)
                      + 4 * (C + L))

    preds = pl.pallas_call(
        bis4crf_kernel,
        out_shape=jax.ShapeDtypeStruct((G, Bt, S), jnp.int32),
        grid=(G,),
        in_specs=[
            pl.BlockSpec((None, Bt, S), lambda g: (g, 0, 0)),        # ids (mask source)
            pl.BlockSpec((None, rows, E), lambda g: (g, 0, 0)),      # word embeddings
            pl.BlockSpec((None, rows, Lc * C), lambda g: (g, 0, 0)),  # char embeddings (flat)
            full2d(wconv),                # banded conv weight (bf16)
            full2d(params['cnn_b']),      # conv bias          (f32)
            full2d(wpw),                  # proj (word half,   bf16)
            full2d(wpc),                  # proj (char half,   bf16)
            full2d(wq),                   # query (scaled,     bf16)
            full2d(wk),                   # key                (bf16)
            full2d(wv),                   # value              (bf16)
            full2d(wfc),                  # fc weight          (bf16)
            full2d(params['fc_b']),       # fc bias            (f32)
        ],
        out_specs=pl.BlockSpec((None, Bt, S), lambda g: (g, 0, 0)),   # lane-dense preds
        compiler_params=pltpu.CompilerParams(
            dimension_semantics=("parallel",),       # batch-tile axis -> both TCs on v7x
            vmem_limit_bytes=32 * 1024 * 1024),
        cost_estimate=pl.CostEstimate(
            flops=flops,
            transcendentals=B * S * (S + 1),
            bytes_accessed=bytes_accessed),
    )(ids, word_embs, char_embs, wconv, params['cnn_b'],
      wpw, wpc, wq, wk, wv, wfc, params['fc_b'])
    return preds.reshape(B, S)


# ----------------------------------------------------------------------------
# Deterministic parameter init + demo
# ----------------------------------------------------------------------------
def init_params(key, emb_size, hidden_size, word_num, label_num,
                char_vocab_size, char_emb_dim):
    ks = jax.random.split(key, 11)
    s = 0.1
    return {
        'word_emb': s * jax.random.normal(ks[0], (word_num, emb_size), jnp.float32),
        'char_emb': s * jax.random.normal(ks[1], (char_vocab_size, char_emb_dim), jnp.float32),
        # Conv2d weight (O, 1, 5, C) stored in kernel layout (K, C_in, O)
        'cnn_w': s * jax.random.normal(ks[2], (KSIZE, char_emb_dim, char_emb_dim), jnp.float32),
        'cnn_b': s * jax.random.normal(ks[3], (1, char_emb_dim), jnp.float32),
        # nn.Linear weights pre-transposed (in, out); proj_ssm split at the word/char seam
        'proj_w_word': s * jax.random.normal(ks[4], (emb_size, hidden_size), jnp.float32),
        'proj_w_char': s * jax.random.normal(ks[5], (char_emb_dim, hidden_size), jnp.float32),
        'q_w': s * jax.random.normal(ks[6], (hidden_size, hidden_size), jnp.float32),
        'k_w': s * jax.random.normal(ks[7], (hidden_size, hidden_size), jnp.float32),
        'v_w': s * jax.random.normal(ks[8], (hidden_size, hidden_size), jnp.float32),
        'fc_w': s * jax.random.normal(ks[9], (hidden_size, label_num), jnp.float32),
        'fc_b': s * jax.random.normal(ks[10], (1, label_num), jnp.float32),
    }


if __name__ == "__main__":
    B, S = 2, 8
    emb_size, hidden_size = 16, 32
    word_num, label_num = 50, 10
    char_vocab_size, char_emb_dim = 30, 8

    key = jax.random.PRNGKey(0)
    kp, ki, kc = jax.random.split(key, 3)

    params = init_params(kp, emb_size, hidden_size, word_num, label_num,
                         char_vocab_size, char_emb_dim)

    input_ids = jax.random.randint(ki, (B, S), 1, word_num, dtype=jnp.int32)
    input_ids = input_ids.at[0, -1].set(0)   # one padding token -> exercises the key mask
    char_input_ids = jax.random.randint(kc, (B, S, MAX_CHAR_LEN), 0, char_vocab_size,
                                        dtype=jnp.int32)

    preds = jax.jit(bis4crf_forward)(params, input_ids, char_input_ids)
    preds = jax.block_until_ready(preds)

    assert preds.shape == (B, S) and preds.dtype == jnp.int32
    print("KERNEL_OK")
</pallas_src>

<mosaic_0001>
module attributes {stable_mosaic.version = 11 : i64} {
  func.func @bis4crf_kernel(%arg0: i32, %arg1: memref<1x1x8xi32, #tpu.memory_space<vmem>>, %arg2: memref<1x8x16xbf16, #tpu.memory_space<vmem>>, %arg3: memref<1x8x120xbf16, #tpu.memory_space<vmem>>, %arg4: memref<120x120xbf16, #tpu.memory_space<vmem>>, %arg5: memref<1x8xf32, #tpu.memory_space<vmem>>, %arg6: memref<16x32xbf16, #tpu.memory_space<vmem>>, %arg7: memref<8x32xbf16, #tpu.memory_space<vmem>>, %arg8: memref<32x32xbf16, #tpu.memory_space<vmem>>, %arg9: memref<32x32xbf16, #tpu.memory_space<vmem>>, %arg10: memref<32x32xbf16, #tpu.memory_space<vmem>>, %arg11: memref<32x10xbf16, #tpu.memory_space<vmem>>, %arg12: memref<1x10xf32, #tpu.memory_space<vmem>>, %arg13: memref<1x1x8xi32, #tpu.memory_space<vmem>>) attributes {dimension_semantics = [#tpu.dimension_semantics<parallel>], iteration_bounds = array<i64: 2>, scalar_prefetch = 0 : i64, scratch_operands = 0 : i64, tpu.core_type = #tpu.core_type<tc>, window_params = [{transform_indices = @transform_0, window_bounds = array<i64: 1, 1, 8>}, {transform_indices = @transform_1, window_bounds = array<i64: 1, 8, 16>}, {transform_indices = @transform_2, window_bounds = array<i64: 1, 8, 120>}, {pipeline_mode = #tpu.pipeline_mode<synchronous>, transform_indices = @transform_3, window_bounds = array<i64: 120, 120>}, {pipeline_mode = #tpu.pipeline_mode<synchronous>, transform_indices = @transform_4, window_bounds = array<i64: 1, 8>}, {pipeline_mode = #tpu.pipeline_mode<synchronous>, transform_indices = @transform_5, window_bounds = array<i64: 16, 32>}, {pipeline_mode = #tpu.pipeline_mode<synchronous>, transform_indices = @transform_6, window_bounds = array<i64: 8, 32>}, {pipeline_mode = #tpu.pipeline_mode<synchronous>, transform_indices = @transform_7, window_bounds = array<i64: 32, 32>}, {pipeline_mode = #tpu.pipeline_mode<synchronous>, transform_indices = @transform_8, window_bounds = array<i64: 32, 32>}, {pipeline_mode = #tpu.pipeline_mode<synchronous>, transform_indices = @transform_9, window_bounds = array<i64: 32, 32>}, {pipeline_mode = #tpu.pipeline_mode<synchronous>, transform_indices = @transform_10, window_bounds = array<i64: 32, 10>}, {pipeline_mode = #tpu.pipeline_mode<synchronous>, transform_indices = @transform_11, window_bounds = array<i64: 1, 10>}, {transform_indices = @transform_12, window_bounds = array<i64: 1, 1, 8>}]} {
    %c0 = arith.constant 0 : index
    %c0_0 = arith.constant 0 : index
    %c0_1 = arith.constant 0 : index
    %0 = vector.load %arg3[%c0, %c0_0, %c0_1] : memref<1x8x120xbf16, #tpu.memory_space<vmem>>, vector<1x8x120xbf16>
    %1 = vector.shape_cast %0 : vector<1x8x120xbf16> to vector<8x120xbf16>
    %c0_2 = arith.constant 0 : index
    %c0_3 = arith.constant 0 : index
    %2 = vector.load %arg4[%c0_2, %c0_3] : memref<120x120xbf16, #tpu.memory_space<vmem>>, vector<120x120xbf16>
    %cst = arith.constant dense<0.000000e+00> : vector<8x120xf32>
    %3 = tpu.matmul %1, %2, %cst {dimension_numbers = #tpu.dot_dimension_numbers<[1], [0], [0], [1], [0, 0, 1, 1], [], []>} : vector<8x120xbf16>, vector<120x120xbf16>, vector<8x120xf32> -> vector<8x120xf32>
    %4 = vector.extract_strided_slice %3 {offsets = [0, 0], sizes = [8, 8], strides = [1, 1]} : vector<8x120xf32> to vector<8x8xf32>
    %5 = vector.extract_strided_slice %3 {offsets = [0, 8], sizes = [8, 8], strides = [1, 1]} : vector<8x120xf32> to vector<8x8xf32>
    %6 = arith.maximumf %4, %5 : vector<8x8xf32>
    %7 = vector.extract_strided_slice %3 {offsets = [0, 16], sizes = [8, 8], strides = [1, 1]} : vector<8x120xf32> to vector<8x8xf32>
    %8 = arith.maximumf %6, %7 : vector<8x8xf32>
    %9 = vector.extract_strided_slice %3 {offsets = [0, 24], sizes = [8, 8], strides = [1, 1]} : vector<8x120xf32> to vector<8x8xf32>
    %10 = arith.maximumf %8, %9 : vector<8x8xf32>
    %11 = vector.extract_strided_slice %3 {offsets = [0, 32], sizes = [8, 8], strides = [1, 1]} : vector<8x120xf32> to vector<8x8xf32>
    %12 = arith.maximumf %10, %11 : vector<8x8xf32>
    %13 = vector.extract_strided_slice %3 {offsets = [0, 40], sizes = [8, 8], strides = [1, 1]} : vector<8x120xf32> to vector<8x8xf32>
    %14 = arith.maximumf %12, %13 : vector<8x8xf32>
    %15 = vector.extract_strided_slice %3 {offsets = [0, 48], sizes = [8, 8], strides = [1, 1]} : vector<8x120xf32> to vector<8x8xf32>
    %16 = arith.maximumf %14, %15 : vector<8x8xf32>
    %17 = vector.extract_strided_slice %3 {offsets = [0, 56], sizes = [8, 8], strides = [1, 1]} : vector<8x120xf32> to vector<8x8xf32>
    %18 = arith.maximumf %16, %17 : vector<8x8xf32>
    %19 = vector.extract_strided_slice %3 {offsets = [0, 64], sizes = [8, 8], strides = [1, 1]} : vector<8x120xf32> to vector<8x8xf32>
    %20 = arith.maximumf %18, %19 : vector<8x8xf32>
    %21 = vector.extract_strided_slice %3 {offsets = [0, 72], sizes = [8, 8], strides = [1, 1]} : vector<8x120xf32> to vector<8x8xf32>
    %22 = arith.maximumf %20, %21 : vector<8x8xf32>
    %23 = vector.extract_strided_slice %3 {offsets = [0, 80], sizes = [8, 8], strides = [1, 1]} : vector<8x120xf32> to vector<8x8xf32>
    %24 = arith.maximumf %22, %23 : vector<8x8xf32>
    %25 = vector.extract_strided_slice %3 {offsets = [0, 88], sizes = [8, 8], strides = [1, 1]} : vector<8x120xf32> to vector<8x8xf32>
    %26 = arith.maximumf %24, %25 : vector<8x8xf32>
    %27 = vector.extract_strided_slice %3 {offsets = [0, 96], sizes = [8, 8], strides = [1, 1]} : vector<8x120xf32> to vector<8x8xf32>
    %28 = arith.maximumf %26, %27 : vector<8x8xf32>
    %29 = vector.extract_strided_slice %3 {offsets = [0, 104], sizes = [8, 8], strides = [1, 1]} : vector<8x120xf32> to vector<8x8xf32>
    %30 = arith.maximumf %28, %29 : vector<8x8xf32>
    %31 = vector.extract_strided_slice %3 {offsets = [0, 112], sizes = [8, 8], strides = [1, 1]} : vector<8x120xf32> to vector<8x8xf32>
    %32 = arith.maximumf %30, %31 : vector<8x8xf32>
    %c0_4 = arith.constant 0 : index
    %c0_5 = arith.constant 0 : index
    %33 = vector.load %arg5[%c0_4, %c0_5] : memref<1x8xf32, #tpu.memory_space<vmem>>, vector<1x8xf32>
    %34 = vector.broadcast %33 : vector<1x8xf32> to vector<8x8xf32>
    %35 = arith.addf %32, %34 : vector<8x8xf32>
    %c0_6 = arith.constant 0 : index
    %c0_7 = arith.constant 0 : index
    %c0_8 = arith.constant 0 : index
    %36 = vector.load %arg2[%c0_6, %c0_7, %c0_8] : memref<1x8x16xbf16, #tpu.memory_space<vmem>>, vector<1x8x16xbf16>
    %37 = vector.shape_cast %36 : vector<1x8x16xbf16> to vector<8x16xbf16>
    %c0_9 = arith.constant 0 : index
    %c0_10 = arith.constant 0 : index
    %38 = vector.load %arg6[%c0_9, %c0_10] : memref<16x32xbf16, #tpu.memory_space<vmem>>, vector<16x32xbf16>
    %cst_11 = arith.constant dense<0.000000e+00> : vector<8x32xf32>
    %39 = tpu.matmul %37, %38, %cst_11 {dimension_numbers = #tpu.dot_dimension_numbers<[1], [0], [0], [1], [0, 0, 1, 1], [], []>} : vector<8x16xbf16>, vector<16x32xbf16>, vector<8x32xf32> -> vector<8x32xf32>
    %40 = arith.truncf %35 : vector<8x8xf32> to vector<8x8xbf16>
    %c0_12 = arith.constant 0 : index
    %c0_13 = arith.constant 0 : index
    %41 = vector.load %arg7[%c0_12, %c0_13] : memref<8x32xbf16, #tpu.memory_space<vmem>>, vector<8x32xbf16>
    %cst_14 = arith.constant dense<0.000000e+00> : vector<8x32xf32>
    %42 = tpu.matmul %40, %41, %cst_14 {dimension_numbers = #tpu.dot_dimension_numbers<[1], [0], [0], [1], [0, 0, 1, 1], [], []>} : vector<8x8xbf16>, vector<8x32xbf16>, vector<8x32xf32> -> vector<8x32xf32>
    %43 = arith.addf %39, %42 : vector<8x32xf32>
    %44 = arith.truncf %43 : vector<8x32xf32> to vector<8x32xbf16>
    %c0_15 = arith.constant 0 : index
    %c0_16 = arith.constant 0 : index
    %45 = vector.load %arg8[%c0_15, %c0_16] : memref<32x32xbf16, #tpu.memory_space<vmem>>, vector<32x32xbf16>
    %cst_17 = arith.constant dense<0.000000e+00> : vector<8x32xf32>
    %46 = tpu.matmul %44, %45, %cst_17 {dimension_numbers = #tpu.dot_dimension_numbers<[1], [0], [0], [1], [0, 0, 1, 1], [], []>} : vector<8x32xbf16>, vector<32x32xbf16>, vector<8x32xf32> -> vector<8x32xf32>
    %47 = vector.shape_cast %46 : vector<8x32xf32> to vector<1x8x32xf32>
    %c0_18 = arith.constant 0 : index
    %c0_19 = arith.constant 0 : index
    %48 = vector.load %arg9[%c0_18, %c0_19] : memref<32x32xbf16, #tpu.memory_space<vmem>>, vector<32x32xbf16>
    %cst_20 = arith.constant dense<0.000000e+00> : vector<8x32xf32>
    %49 = tpu.matmul %44, %48, %cst_20 {dimension_numbers = #tpu.dot_dimension_numbers<[1], [0], [0], [1], [0, 0, 1, 1], [], []>} : vector<8x32xbf16>, vector<32x32xbf16>, vector<8x32xf32> -> vector<8x32xf32>
    %50 = vector.shape_cast %49 : vector<8x32xf32> to vector<1x8x32xf32>
    %c0_21 = arith.constant 0 : index
    %c0_22 = arith.constant 0 : index
    %51 = vector.load %arg10[%c0_21, %c0_22] : memref<32x32xbf16, #tpu.memory_space<vmem>>, vector<32x32xbf16>
    %cst_23 = arith.constant dense<0.000000e+00> : vector<8x32xf32>
    %52 = tpu.matmul %44, %51, %cst_23 {dimension_numbers = #tpu.dot_dimension_numbers<[1], [0], [0], [1], [0, 0, 1, 1], [], []>} : vector<8x32xbf16>, vector<32x32xbf16>, vector<8x32xf32> -> vector<8x32xf32>
    %53 = vector.shape_cast %52 : vector<8x32xf32> to vector<1x8x32xf32>
    %54 = arith.truncf %47 : vector<1x8x32xf32> to vector<1x8x32xbf16>
    %55 = arith.truncf %50 : vector<1x8x32xf32> to vector<1x8x32xbf16>
    "tpu.trace_start"() <{level = 10 : i32, message = "bqh,bkh->bqk"}> : () -> ()
    %cst_24 = arith.constant dense<0.000000e+00> : vector<1x8x8xf32>
    %56 = tpu.matmul %54, %55, %cst_24 {dimension_numbers = #tpu.dot_dimension_numbers<[2], [2], [1], [1], [0, 0, 0, 1, 1, 1], [0], [0]>} : vector<1x8x32xbf16>, vector<1x8x32xbf16>, vector<1x8x8xf32> -> vector<1x8x8xf32>
    "tpu.trace_stop"() : () -> ()
    %c0_25 = arith.constant 0 : index
    %c0_26 = arith.constant 0 : index
    %c0_27 = arith.constant 0 : index
    %57 = vector.load %arg1[%c0_25, %c0_26, %c0_27] : memref<1x1x8xi32, #tpu.memory_space<vmem>>, vector<1x1x8xi32>
    %58 = vector.shape_cast %57 : vector<1x1x8xi32> to vector<1x8xi32>
    %c0_i32 = arith.constant 0 : i32
    %59 = vector.broadcast %c0_i32 : i32 to vector<1x8xi32>
    %60 = arith.cmpi ne, %58, %59 : vector<1x8xi32>
    %61 = vector.shape_cast %60 : vector<1x8xi1> to vector<1x1x8xi1>
    %cst_28 = arith.constant -1.000000e+30 : f32
    %62 = vector.shape_cast %61 : vector<1x1x8xi1> to vector<1x1x8xi1>
    %63 = vector.broadcast %62 : vector<1x1x8xi1> to vector<1x8x8xi1>
    %64 = vector.broadcast %cst_28 : f32 to vector<1x8x8xf32>
    %65 = arith.select %63, %56, %64 : vector<1x8x8xi1>, vector<1x8x8xf32>
    %cst_29 = arith.constant dense<0xFF800000> : vector<1x8xf32>
    %66 = vector.multi_reduction <maximumf>, %65, %cst_29 [2] : vector<1x8x8xf32> to vector<1x8xf32>
    %67 = vector.shape_cast %66 : vector<1x8xf32> to vector<1x8x1xf32>
    %68 = vector.broadcast %67 : vector<1x8x1xf32> to vector<1x8x8xf32>
    %69 = arith.subf %65, %68 : vector<1x8x8xf32>
    %70 = math.exp %69 : vector<1x8x8xf32>
    %cst_30 = arith.constant dense<0.000000e+00> : vector<1x8xf32>
    %71 = vector.multi_reduction <add>, %70, %cst_30 [2] : vector<1x8x8xf32> to vector<1x8xf32>
    %72 = vector.shape_cast %71 : vector<1x8xf32> to vector<1x8x1xf32>
    %73 = tpu.reciprocal %72 {approx = true} : vector<1x8x1xf32> -> vector<1x8x1xf32>
    %74 = vector.broadcast %73 : vector<1x8x1xf32> to vector<1x8x8xf32>
    %75 = arith.mulf %70, %74 : vector<1x8x8xf32>
    %76 = arith.truncf %75 : vector<1x8x8xf32> to vector<1x8x8xbf16>
    %77 = arith.truncf %53 : vector<1x8x32xf32> to vector<1x8x32xbf16>
    "tpu.trace_start"() <{level = 10 : i32, message = "bqk,bkh->bqh"}> : () -> ()
    %cst_31 = arith.constant dense<0.000000e+00> : vector<1x8x32xf32>
    %78 = tpu.matmul %76, %77, %cst_31 {dimension_numbers = #tpu.dot_dimension_numbers<[2], [1], [1], [2], [0, 0, 0, 1, 1, 2], [0], [0]>} : vector<1x8x8xbf16>, vector<1x8x32xbf16>, vector<1x8x32xf32> -> vector<1x8x32xf32>
    "tpu.trace_stop"() : () -> ()
    %79 = vector.shape_cast %78 : vector<1x8x32xf32> to vector<8x32xf32>
    %80 = arith.truncf %79 : vector<8x32xf32> to vector<8x32xbf16>
    %c0_32 = arith.constant 0 : index
    %c0_33 = arith.constant 0 : index
    %81 = vector.load %arg11[%c0_32, %c0_33] : memref<32x10xbf16, #tpu.memory_space<vmem>>, vector<32x10xbf16>
    %cst_34 = arith.constant dense<0.000000e+00> : vector<8x10xf32>
    %82 = tpu.matmul %80, %81, %cst_34 {dimension_numbers = #tpu.dot_dimension_numbers<[1], [0], [0], [1], [0, 0, 1, 1], [], []>} : vector<8x32xbf16>, vector<32x10xbf16>, vector<8x10xf32> -> vector<8x10xf32>
    %c0_35 = arith.constant 0 : index
    %c0_36 = arith.constant 0 : index
    %83 = vector.load %arg12[%c0_35, %c0_36] : memref<1x10xf32, #tpu.memory_space<vmem>>, vector<1x10xf32>
    %84 = vector.broadcast %83 : vector<1x10xf32> to vector<8x10xf32>
    %85 = arith.addf %82, %84 : vector<8x10xf32>
    %86 = vector.shape_cast %85 : vector<8x10xf32> to vector<1x8x10xf32>
    %cst_37 = arith.constant dense<0xFF800000> : vector<1x8xf32>
    %87 = vector.multi_reduction <maximumf>, %86, %cst_37 [2] : vector<1x8x10xf32> to vector<1x8xf32>
    %88 = vector.shape_cast %87 : vector<1x8xf32> to vector<1x8x1xf32>
    %89 = tpu.iota {dimensions = array<i32: 2>} : vector<1x8x10xi32>
    %90 = arith.sitofp %89 : vector<1x8x10xi32> to vector<1x8x10xf32>
    %91 = vector.broadcast %88 : vector<1x8x1xf32> to vector<1x8x10xf32>
    %92 = arith.cmpf oeq, %86, %91 : vector<1x8x10xf32>
    %cst_38 = arith.constant 1.000000e+01 : f32
    %93 = vector.broadcast %cst_38 : f32 to vector<1x8x10xf32>
    %94 = arith.select %92, %90, %93 : vector<1x8x10xi1>, vector<1x8x10xf32>
    %cst_39 = arith.constant dense<0x7F800000> : vector<1x8xf32>
    %95 = vector.multi_reduction <minimumf>, %94, %cst_39 [2] : vector<1x8x10xf32> to vector<1x8xf32>
    %96 = arith.fptosi %95 : vector<1x8xf32> to vector<1x8xi32>
    %c0_40 = arith.constant 0 : index
    %c0_41 = arith.constant 0 : index
    %c0_42 = arith.constant 0 : index
    %97 = vector.load %arg13[%c0_40, %c0_41, %c0_42] : memref<1x1x8xi32, #tpu.memory_space<vmem>>, vector<1x1x8xi32>
    %98 = vector.shape_cast %97 : vector<1x1x8xi32> to vector<1x8xi32>
    %99 = vector.shape_cast %96 : vector<1x8xi32> to vector<1x1x8xi32>
    tpu.vector_store %arg13[%c0_40, %c0_41, %c0_42], %99 {strides = array<i32>} : memref<1x1x8xi32, #tpu.memory_space<vmem>>, vector<1x1x8xi32>,
    return
  }
  func.func @transform_0(%arg0: i32) -> (i32, i32, i32) {
    %c0_i32 = arith.constant 0 : i32
    %c0_i32_0 = arith.constant 0 : i32
    %c0_i32_1 = arith.constant 0 : i32
    return %arg0, %c0_i32, %c0_i32_0 : i32, i32, i32
  }
  func.func @transform_1(%arg0: i32) -> (i32, i32, i32) {
    %c0_i32 = arith.constant 0 : i32
    %c0_i32_0 = arith.constant 0 : i32
    %c0_i32_1 = arith.constant 0 : i32
    return %arg0, %c0_i32, %c0_i32_0 : i32, i32, i32
  }
  func.func @transform_2(%arg0: i32) -> (i32, i32, i32) {
    %c0_i32 = arith.constant 0 : i32
    %c0_i32_0 = arith.constant 0 : i32
    %c0_i32_1 = arith.constant 0 : i32
    return %arg0, %c0_i32, %c0_i32_0 : i32, i32, i32
  }
  func.func @transform_3(%arg0: i32) -> (i32, i32) {
    %c0_i32 = arith.constant 0 : i32
    %c0_i32_0 = arith.constant 0 : i32
    %c0_i32_1 = arith.constant 0 : i32
    return %c0_i32, %c0_i32_0 : i32, i32
  }
  func.func @transform_4(%arg0: i32) -> (i32, i32) {
    %c0_i32 = arith.constant 0 : i32
    %c0_i32_0 = arith.constant 0 : i32
    %c0_i32_1 = arith.constant 0 : i32
    return %c0_i32, %c0_i32_0 : i32, i32
  }
  func.func @transform_5(%arg0: i32) -> (i32, i32) {
    %c0_i32 = arith.constant 0 : i32
    %c0_i32_0 = arith.constant 0 : i32
    %c0_i32_1 = arith.constant 0 : i32
    return %c0_i32, %c0_i32_0 : i32, i32
  }
  func.func @transform_6(%arg0: i32) -> (i32, i32) {
    %c0_i32 = arith.constant 0 : i32
    %c0_i32_0 = arith.constant 0 : i32
    %c0_i32_1 = arith.constant 0 : i32
    return %c0_i32, %c0_i32_0 : i32, i32
  }
  func.func @transform_7(%arg0: i32) -> (i32, i32) {
    %c0_i32 = arith.constant 0 : i32
    %c0_i32_0 = arith.constant 0 : i32
    %c0_i32_1 = arith.constant 0 : i32
    return %c0_i32, %c0_i32_0 : i32, i32
  }
  func.func @transform_8(%arg0: i32) -> (i32, i32) {
    %c0_i32 = arith.constant 0 : i32
    %c0_i32_0 = arith.constant 0 : i32
    %c0_i32_1 = arith.constant 0 : i32
    return %c0_i32, %c0_i32_0 : i32, i32
  }
  func.func @transform_9(%arg0: i32) -> (i32, i32) {
    %c0_i32 = arith.constant 0 : i32
    %c0_i32_0 = arith.constant 0 : i32
    %c0_i32_1 = arith.constant 0 : i32
    return %c0_i32, %c0_i32_0 : i32, i32
  }
  func.func @transform_10(%arg0: i32) -> (i32, i32) {
    %c0_i32 = arith.constant 0 : i32
    %c0_i32_0 = arith.constant 0 : i32
    %c0_i32_1 = arith.constant 0 : i32
    return %c0_i32, %c0_i32_0 : i32, i32
  }
  func.func @transform_11(%arg0: i32) -> (i32, i32) {
    %c0_i32 = arith.constant 0 : i32
    %c0_i32_0 = arith.constant 0 : i32
    %c0_i32_1 = arith.constant 0 : i32
    return %c0_i32, %c0_i32_0 : i32, i32
  }
  func.func @transform_12(%arg0: i32) -> (i32, i32, i32) {
    %c0_i32 = arith.constant 0 : i32
    %c0_i32_0 = arith.constant 0 : i32
    %c0_i32_1 = arith.constant 0 : i32
    return %arg0, %c0_i32, %c0_i32_0 : i32, i32, i32
  }
}

</mosaic_0001>

<llo_original>
// kernel: bis4crf_forward.1
$region0: #{bis4crf_forward.1}
  #allocation0 [shape = 'u32[]', space=smem, size = 0x4, offset = 0x4, fixed_abs, tag = 'smem constant byte address 0x4 - core index']
  #allocation1 [shape = 'u32[144,128]{1,0:T(1,128)}', space=vmem, size = 0x12000, scoped, tag = 'internal scratch']
  %s0 = inlined_call_operand.vmem [shape: s32[2,1,8], index: 0, kind: input, shape index: {}]
  %s1 = inlined_call_operand.vmem [shape: bf16[2,8,16], index: 1, kind: input, shape index: {}]
  %s2 = inlined_call_operand.vmem [shape: bf16[2,8,120], index: 2, kind: input, shape index: {}]
  %s3 = inlined_call_operand.vmem [shape: bf16[120,120], index: 3, kind: input, shape index: {}]
  %s4 = inlined_call_operand.vmem [shape: f32[1,8], index: 4, kind: input, shape index: {}]
  %s5 = inlined_call_operand.vmem [shape: bf16[16,32], index: 5, kind: input, shape index: {}]
  %s6 = inlined_call_operand.vmem [shape: bf16[8,32], index: 6, kind: input, shape index: {}]
  %s7 = inlined_call_operand.vmem [shape: bf16[32,32], index: 7, kind: input, shape index: {}]
  %s8 = inlined_call_operand.vmem [shape: bf16[32,32], index: 8, kind: input, shape index: {}]
  %s9 = inlined_call_operand.vmem [shape: bf16[32,32], index: 9, kind: input, shape index: {}]
  %s10 = inlined_call_operand.vmem [shape: bf16[32,10], index: 10, kind: input, shape index: {}]
  %s11 = inlined_call_operand.vmem [shape: f32[1,10], index: 11, kind: input, shape index: {}]
  %s12 = inlined_call_operand.hbm [shape: s32[2,1,8], index: 12, kind: output, shape index: {}]
  %s13 = sld [smem:[#allocation0]]
  $region81: #{bis4crf_forward.1} parent=0
    _
  %s15 = ssub.s32 1, %s13
  %s16 = scalar_select 0, %s15, %s13
  $region1: #{bis4crf_forward.1} parent=0
    #allocation2 [shape = 'u8[1024]{0}', space=vmem, size = 0x400, scoped, tag = 'output window, operand 0']
    #allocation3 [shape = 's32[2]{0}', space=sflag, size = 0x8, scoped, tag = 'scoped memory for bis4crf_forward.1']
    %17 = vsyncpa [#allocation3], 0
    %s18 = scalar_lea.sflag [#allocation3], 1
    %19 = vsyncpa %s18, 0
    loop: start=0, step=1, limit=4
    $region2: #{bis4crf_forward.1} parent=1 // loop_pre_header
      _
    $region3: #{bis4crf_forward.1} parent=1 // loop_header
      %s21 = sphi 0, %s25
      %p22 = scmp.ge.s32.totalorder %s21, 4
      %s31 = sphi 0, %s33
      %s34 = sphi 0, %s31
      %s35 = sphi 0, %s34
      %s51 = sphi 0, %s35
      %s57 = sphi 0, %s59
      %s60 = sphi 0, %s57
      %s61 = sphi 0, %s60
      %s77 = sphi 0, %s61
      %s83 = sphi 0, %s85
      %s86 = sphi 0, %s83
      %s87 = sphi 0, %s86
      %s103 = sphi 0, %s87
      %s107 = sphi 0, %s107
      %s109 = sphi 0, %s107
      %s110 = sphi 0, %s109
      %s124 = sphi 0, %s110
      %s128 = sphi 0, %s128
      %s130 = sphi 0, %s128
      %s131 = sphi 0, %s130
      %s145 = sphi 0, %s131
      %s149 = sphi 0, %s149
      %s151 = sphi 0, %s149
      %s152 = sphi 0, %s151
      %s166 = sphi 0, %s152
      %s170 = sphi 0, %s170
      %s172 = sphi 0, %s170
      %s173 = sphi 0, %s172
      %s187 = sphi 0, %s173
      %s191 = sphi 0, %s191
      %s193 = sphi 0, %s191
      %s194 = sphi 0, %s193
      %s208 = sphi 0, %s194
      %s212 = sphi 0, %s212
      %s214 = sphi 0, %s212
      %s215 = sphi 0, %s214
      %s229 = sphi 0, %s215
      %s233 = sphi 0, %s233
      %s235 = sphi 0, %s233
      %s236 = sphi 0, %s235
      %s250 = sphi 0, %s236
      %s254 = sphi 0, %s254
      %s256 = sphi 0, %s254
      %s257 = sphi 0, %s256
      %s271 = sphi 0, %s257
      %s275 = sphi 0, %s275
      %s277 = sphi 0, %s275
      %s278 = sphi 0, %s277
      %s292 = sphi 0, %s278
      %s298 = sphi 0, %s300
      %s301 = sphi 0, %s298
      %s302 = sphi 0, %s301
      %s318 = sphi 0, %s302
    $region4: #{bis4crf_forward.1} parent=1 // loop_header_branch
      %24 = sbr.rel (%p22) target = $region8
    $region5: #{bis4crf_forward.1} parent=1 // loop_body
      %s26 = ssub.s32 %s21, 1
      %s27 = ssub.s32 %s21, 2
      %s28 = sadd.s32 %s21, 1
      %s29 = ssub.s32 %s21, %s28
      %p30 = scmp.eq.s32.totalorder %s29, 0
      %s32 = sadd.s32 %s31, 1
      %s33 = scalar_select %p30, %s31, %s32
      %p36 = pneg %p30
      %p37 = scmp.eq.s32.totalorder %s21, 1
      %p38 = por %p36, %p37
      %p39 = scmp.ne.s32.totalorder %s31, %s34
      %p40 = scmp.eq.s32.totalorder %s21, 0
      %p41 = por %p39, %p40
      %p42 = scmp.ne.s32.totalorder %s31, %s34
      %p43 = scmp.eq.s32.totalorder %s26, 1
      %p44 = por %p42, %p43
      %p45 = scmp.ne.s32.totalorder %s34, %s35
      %p46 = scmp.eq.s32.totalorder %s26, 0
      %p47 = por %p45, %p46
      %p48 = scmp.ne.s32.totalorder %s34, %s35
      %p49 = scmp.eq.s32.totalorder %s27, 1
      %p50 = por %p48, %p49
      %p52 = scmp.ne.s32.totalorder %s35, %s51
      %p53 = scmp.eq.s32.totalorder %s27, 0
      %p54 = por %p52, %p53
      %s55 = ssub.s32 %s21, %s28
      %p56 = scmp.eq.s32.totalorder %s55, 0
      %s58 = sadd.s32 %s57, 1
      %s59 = scalar_select %p56, %s57, %s58
      %p62 = pneg %p56
      %p63 = scmp.eq.s32.totalorder %s21, 1
      %p64 = por %p62, %p63
      %p65 = scmp.ne.s32.totalorder %s57, %s60
      %p66 = scmp.eq.s32.totalorder %s21, 0
      %p67 = por %p65, %p66
      %p68 = scmp.ne.s32.totalorder %s57, %s60
      %p69 = scmp.eq.s32.totalorder %s26, 1
      %p70 = por %p68, %p69
      %p71 = scmp.ne.s32.totalorder %s60, %s61
      %p72 = scmp.eq.s32.totalorder %s26, 0
      %p73 = por %p71, %p72
      %p74 = scmp.ne.s32.totalorder %s60, %s61
      %p75 = scmp.eq.s32.totalorder %s27, 1
      %p76 = por %p74, %p75
      %p78 = scmp.ne.s32.totalorder %s61, %s77
      %p79 = scmp.eq.s32.totalorder %s27, 0
      %p80 = por %p78, %p79
      %s81 = ssub.s32 %s21, %s28
      %p82 = scmp.eq.s32.totalorder %s81, 0
      %s84 = sadd.s32 %s83, 1
      %s85 = scalar_select %p82, %s83, %s84
      %p88 = pneg %p82
      %p89 = scmp.eq.s32.totalorder %s21, 1
      %p90 = por %p88, %p89
      %p91 = scmp.ne.s32.totalorder %s83, %s86
      %p92 = scmp.eq.s32.totalorder %s21, 0
      %p93 = por %p91, %p92
      %p94 = scmp.ne.s32.totalorder %s83, %s86
      %p95 = scmp.eq.s32.totalorder %s26, 1
      %p96 = por %p94, %p95
      %p97 = scmp.ne.s32.totalorder %s86, %s87
      %p98 = scmp.eq.s32.totalorder %s26, 0
      %p99 = por %p97, %p98
      %p100 = scmp.ne.s32.totalorder %s86, %s87
      %p101 = scmp.eq.s32.totalorder %s27, 1
      %p102 = por %p100, %p101
      %p104 = scmp.ne.s32.totalorder %s87, %s103
      %p105 = scmp.eq.s32.totalorder %s27, 0
      %p106 = por %p104, %p105
      %s108 = sadd.s32 %s107, 1
      %p111 = scmp.eq.s32.totalorder %s21, 1
      %p112 = scmp.ne.s32.totalorder %s107, %s109
      %p113 = scmp.eq.s32.totalorder %s21, 0
      %p114 = por %p112, %p113
      %p115 = scmp.ne.s32.totalorder %s107, %s109
      %p116 = scmp.eq.s32.totalorder %s26, 1
      %p117 = por %p115, %p116
      %p118 = scmp.ne.s32.totalorder %s109, %s110
      %p119 = scmp.eq.s32.totalorder %s26, 0
      %p120 = por %p118, %p119
      %p121 = scmp.ne.s32.totalorder %s109, %s110
      %p122 = scmp.eq.s32.totalorder %s27, 1
      %p123 = por %p121, %p122
      %p125 = scmp.ne.s32.totalorder %s110, %s124
      %p126 = scmp.eq.s32.totalorder %s27, 0
      %p127 = por %p125, %p126
      %s129 = sadd.s32 %s128, 1
      %p132 = scmp.eq.s32.totalorder %s21, 1
      %p133 = scmp.ne.s32.totalorder %s128, %s130
      %p134 = scmp.eq.s32.totalorder %s21, 0
      %p135 = por %p133, %p134
      %p136 = scmp.ne.s32.totalorder %s128, %s130
      %p137 = scmp.eq.s32.totalorder %s26, 1
      %p138 = por %p136, %p137
      %p139 = scmp.ne.s32.totalorder %s130, %s131
      %p140 = scmp.eq.s32.totalorder %s26, 0
      %p141 = por %p139, %p140
      %p142 = scmp.ne.s32.totalorder %s130, %s131
      %p143 = scmp.eq.s32.totalorder %s27, 1
      %p144 = por %p142, %p143
      %p146 = scmp.ne.s32.totalorder %s131, %s145
      %p147 = scmp.eq.s32.totalorder %s27, 0
      %p148 = por %p146, %p147
      %s150 = sadd.s32 %s149, 1
      %p153 = scmp.eq.s32.totalorder %s21, 1
      %p154 = scmp.ne.s32.totalorder %s149, %s151
      %p155 = scmp.eq.s32.totalorder %s21, 0
      %p156 = por %p154, %p155
      %p157 = scmp.ne.s32.totalorder %s149, %s151
      %p158 = scmp.eq.s32.totalorder %s26, 1
      %p159 = por %p157, %p158
      %p160 = scmp.ne.s32.totalorder %s151, %s152
      %p161 = scmp.eq.s32.totalorder %s26, 0
      %p162 = por %p160, %p161
      %p163 = scmp.ne.s32.totalorder %s151, %s152
      %p164 = scmp.eq.s32.totalorder %s27, 1
      %p165 = por %p163, %p164
      %p167 = scmp.ne.s32.totalorder %s152, %s166
      %p168 = scmp.eq.s32.totalorder %s27, 0
      %p169 = por %p167, %p168
      %s171 = sadd.s32 %s170, 1
      %p174 = scmp.eq.s32.totalorder %s21, 1
      %p175 = scmp.ne.s32.totalorder %s170, %s172
      %p176 = scmp.eq.s32.totalorder %s21, 0
      %p177 = por %p175, %p176
      %p178 = scmp.ne.s32.totalorder %s170, %s172
      %p179 = scmp.eq.s32.totalorder %s26, 1
      %p180 = por %p178, %p179
      %p181 = scmp.ne.s32.totalorder %s172, %s173
      %p182 = scmp.eq.s32.totalorder %s26, 0
      %p183 = por %p181, %p182
      %p184 = scmp.ne.s32.totalorder %s172, %s173
      %p185 = scmp.eq.s32.totalorder %s27, 1
      %p186 = por %p184, %p185
      %p188 = scmp.ne.s32.totalorder %s173, %s187
      %p189 = scmp.eq.s32.totalorder %s27, 0
      %p190 = por %p188, %p189
      %s192 = sadd.s32 %s191, 1
      %p195 = scmp.eq.s32.totalorder %s21, 1
      %p196 = scmp.ne.s32.totalorder %s191, %s193
      %p197 = scmp.eq.s32.totalorder %s21, 0
      %p198 = por %p196, %p197
      %p199 = scmp.ne.s32.totalorder %s191, %s193
      %p200 = scmp.eq.s32.totalorder %s26, 1
      %p201 = por %p199, %p200
      %p202 = scmp.ne.s32.totalorder %s193, %s194
      %p203 = scmp.eq.s32.totalorder %s26, 0
      %p204 = por %p202, %p203
      %p205 = scmp.ne.s32.totalorder %s193, %s194
      %p206 = scmp.eq.s32.totalorder %s27, 1
      %p207 = por %p205, %p206
      %p209 = scmp.ne.s32.totalorder %s194, %s208
      %p210 = scmp.eq.s32.totalorder %s27, 0
      %p211 = por %p209, %p210
      %s213 = sadd.s32 %s212, 1
      %p216 = scmp.eq.s32.totalorder %s21, 1
      %p217 = scmp.ne.s32.totalorder %s212, %s214
      %p218 = scmp.eq.s32.totalorder %s21, 0
      %p219 = por %p217, %p218
      %p220 = scmp.ne.s32.totalorder %s212, %s214
      %p221 = scmp.eq.s32.totalorder %s26, 1
      %p222 = por %p220, %p221
      %p223 = scmp.ne.s32.totalorder %s214, %s215
      %p224 = scmp.eq.s32.totalorder %s26, 0
      %p225 = por %p223, %p224
      %p226 = scmp.ne.s32.totalorder %s214, %s215
      %p227 = scmp.eq.s32.totalorder %s27, 1
      %p228 = por %p226, %p227
      %p230 = scmp.ne.s32.totalorder %s215, %s229
      %p231 = scmp.eq.s32.totalorder %s27, 0
      %p232 = por %p230, %p231
      %s234 = sadd.s32 %s233, 1
      %p237 = scmp.eq.s32.totalorder %s21, 1
      %p238 = scmp.ne.s32.totalorder %s233, %s235
      %p239 = scmp.eq.s32.totalorder %s21, 0
      %p240 = por %p238, %p239
      %p241 = scmp.ne.s32.totalorder %s233, %s235
      %p242 = scmp.eq.s32.totalorder %s26, 1
      %p243 = por %p241, %p242
      %p244 = scmp.ne.s32.totalorder %s235, %s236
      %p245 = scmp.eq.s32.totalorder %s26, 0
      %p246 = por %p244, %p245
      %p247 = scmp.ne.s32.totalorder %s235, %s236
      %p248 = scmp.eq.s32.totalorder %s27, 1
      %p249 = por %p247, %p248
      %p251 = scmp.ne.s32.totalorder %s236, %s250
      %p252 = scmp.eq.s32.totalorder %s27, 0
      %p253 = por %p251, %p252
      %s255 = sadd.s32 %s254, 1
      %p258 = scmp.eq.s32.totalorder %s21, 1
      %p259 = scmp.ne.s32.totalorder %s254, %s256
      %p260 = scmp.eq.s32.totalorder %s21, 0
      %p261 = por %p259, %p260
      %p262 = scmp.ne.s32.totalorder %s254, %s256
      %p263 = scmp.eq.s32.totalorder %s26, 1
      %p264 = por %p262, %p263
      %p265 = scmp.ne.s32.totalorder %s256, %s257
      %p266 = scmp.eq.s32.totalorder %s26, 0
      %p267 = por %p265, %p266
      %p268 = scmp.ne.s32.totalorder %s256, %s257
      %p269 = scmp.eq.s32.totalorder %s27, 1
      %p270 = por %p268, %p269
      %p272 = scmp.ne.s32.totalorder %s257, %s271
      %p273 = scmp.eq.s32.totalorder %s27, 0
      %p274 = por %p272, %p273
      %s276 = sadd.s32 %s275, 1
      %p279 = scmp.eq.s32.totalorder %s21, 1
      %p280 = scmp.ne.s32.totalorder %s275, %s277
      %p281 = scmp.eq.s32.totalorder %s21, 0
      %p282 = por %p280, %p281
      %p283 = scmp.ne.s32.totalorder %s275, %s277
      %p284 = scmp.eq.s32.totalorder %s26, 1
      %p285 = por %p283, %p284
      %p286 = scmp.ne.s32.totalorder %s277, %s278
      %p287 = scmp.eq.s32.totalorder %s26, 0
      %p288 = por %p286, %p287
      %p289 = scmp.ne.s32.totalorder %s277, %s278
      %p290 = scmp.eq.s32.totalorder %s27, 1
      %p291 = por %p289, %p290
      %p293 = scmp.ne.s32.totalorder %s278, %s292
      %p294 = scmp.eq.s32.totalorder %s27, 0
      %p295 = por %p293, %p294
      %s296 = ssub.s32 %s21, %s28
      %p297 = scmp.eq.s32.totalorder %s296, 0
      %s299 = sadd.s32 %s298, 1
      %s300 = scalar_select %p297, %s298, %s299
      %p303 = pneg %p297
      %p304 = scmp.eq.s32.totalorder %s21, 1
      %p305 = por %p303, %p304
      %p306 = scmp.ne.s32.totalorder %s298, %s301
      %p307 = scmp.eq.s32.totalorder %s21, 0
      %p308 = por %p306, %p307
      %p309 = scmp.ne.s32.totalorder %s298, %s301
      %p310 = scmp.eq.s32.totalorder %s26, 1
      %p311 = por %p309, %p310
      %p312 = scmp.ne.s32.totalorder %s301, %s302
      %p313 = scmp.eq.s32.totalorder %s26, 0
      %p314 = por %p312, %p313
      %p315 = scmp.ne.s32.totalorder %s301, %s302
      %p316 = scmp.eq.s32.totalorder %s27, 1
      %p317 = por %p315, %p316
      %p319 = scmp.ne.s32.totalorder %s302, %s318
      %p320 = scmp.eq.s32.totalorder %s27, 0
      %p321 = por %p319, %p320
      %p322 = scmp.le.s32.totalorder 1, %s21
      %p323 = scmp.lt.s32.totalorder %s21, 3
      %p324 = pnand %p322, %p323
      %p325 = pneg %p324
      // Predicated region
      $region9: #{bis4crf_forward.1} parent=5 // pred_check
        _
      $region10: #{bis4crf_forward.1} parent=5 // pred_check_branch
        %327 = sbr.rel (%p324) target = $region12
      $region11: #{bis4crf_forward.1} parent=5 // pred_region
        %s328 = ssub.s32 %s21, 1
        // Predicated region
        $region13: #{bis4crf_forward.1} parent=11 // pred_check
          %p329 = pneg %p120
        $region14: #{bis4crf_forward.1} parent=11 // pred_check_branch
          %331 = sbr.rel (%p329) target = $region16
        $region15: #{bis4crf_forward.1} parent=11 // pred_region
          _
        $region16: #{bis4crf_forward.1} parent=11 // pred_fallthru
          _
        // Predicated region
        $region17: #{bis4crf_forward.1} parent=11 // pred_check
          %p332 = pneg %p141
        $region18: #{bis4crf_forward.1} parent=11 // pred_check_branch
          %334 = sbr.rel (%p332) target = $region20
        $region19: #{bis4crf_forward.1} parent=11 // pred_region
          _
        $region20: #{bis4crf_forward.1} parent=11 // pred_fallthru
          _
        // Predicated region
        $region21: #{bis4crf_forward.1} parent=11 // pred_check
          %p335 = pneg %p162
        $region22: #{bis4crf_forward.1} parent=11 // pred_check_branch
          %337 = sbr.rel (%p335) target = $region24
        $region23: #{bis4crf_forward.1} parent=11 // pred_region
          _
        $region24: #{bis4crf_forward.1} parent=11 // pred_fallthru
          _
        // Predicated region
        $region25: #{bis4crf_forward.1} parent=11 // pred_check
          %p338 = pneg %p183
        $region26: #{bis4crf_forward.1} parent=11 // pred_check_branch
          %340 = sbr.rel (%p338) target = $region28
        $region27: #{bis4crf_forward.1} parent=11 // pred_region
          _
        $region28: #{bis4crf_forward.1} parent=11 // pred_fallthru
          _
        // Predicated region
        $region29: #{bis4crf_forward.1} parent=11 // pred_check
          %p341 = pneg %p204
        $region30: #{bis4crf_forward.1} parent=11 // pred_check_branch
          %343 = sbr.rel (%p341) target = $region32
        $region31: #{bis4crf_forward.1} parent=11 // pred_region
          _
        $region32: #{bis4crf_forward.1} parent=11 // pred_fallthru
          _
        // Predicated region
        $region33: #{bis4crf_forward.1} parent=11 // pred_check
          %p344 = pneg %p225
        $region34: #{bis4crf_forward.1} parent=11 // pred_check_branch
          %346 = sbr.rel (%p344) target = $region36
        $region35: #{bis4crf_forward.1} parent=11 // pred_region
          _
        $region36: #{bis4crf_forward.1} parent=11 // pred_fallthru
          _
        // Predicated region
        $region37: #{bis4crf_forward.1} parent=11 // pred_check
          %p347 = pneg %p246
        $region38: #{bis4crf_forward.1} parent=11 // pred_check_branch
          %349 = sbr.rel (%p347) target = $region40
        $region39: #{bis4crf_forward.1} parent=11 // pred_region
          _
        $region40: #{bis4crf_forward.1} parent=11 // pred_fallthru
          _
        // Predicated region
        $region41: #{bis4crf_forward.1} parent=11 // pred_check
          %p350 = pneg %p267
        $region42: #{bis4crf_forward.1} parent=11 // pred_check_branch
          %352 = sbr.rel (%p350) target = $region44
        $region43: #{bis4crf_forward.1} parent=11 // pred_region
          _
        $region44: #{bis4crf_forward.1} parent=11 // pred_fallthru
          _
        // Predicated region
        $region45: #{bis4crf_forward.1} parent=11 // pred_check
          %p353 = pneg %p288
        $region46: #{bis4crf_forward.1} parent=11 // pred_check_branch
          %355 = sbr.rel (%p353) target = $region48
        $region47: #{bis4crf_forward.1} parent=11 // pred_region
          _
        $region48: #{bis4crf_forward.1} parent=11 // pred_fallthru
          _
      $region12: #{bis4crf_forward.1} parent=5 // pred_fallthru
        _
      %p356 = scmp.lt.s32.totalorder %s21, 2
      // Predicated region
      $region49: #{bis4crf_forward.1} parent=5 // pred_check
        %p357 = pneg %p356
      $region50: #{bis4crf_forward.1} parent=5 // pred_check_branch
        %359 = sbr.rel (%p357) target = $region52
      $region51: #{bis4crf_forward.1} parent=5 // pred_region
        // Predicated region
        $region53: #{bis4crf_forward.1} parent=51 // pred_check
          %p360 = pneg %p41
        $region54: #{bis4crf_forward.1} parent=51 // pred_check_branch
          %362 = sbr.rel (%p360) target = $region56
        $region55: #{bis4crf_forward.1} parent=51 // pred_region
          %p363 = scmp.lt.s32.totalorder %s21, 1
          %s364 = scalar_select %p363, %s21, 1
          %s365 = scalar_lea.vmem %s0, %s364
        $region56: #{bis4crf_forward.1} parent=51 // pred_fallthru
          _
        // Predicated region
        $region57: #{bis4crf_forward.1} parent=51 // pred_check
          %p366 = pneg %p67
        $region58: #{bis4crf_forward.1} parent=51 // pred_check_branch
          %368 = sbr.rel (%p366) target = $region60
        $region59: #{bis4crf_forward.1} parent=51 // pred_region
          %p369 = scmp.lt.s32.totalorder %s21, 1
          %s370 = scalar_select %p369, %s21, 1
          %s371 = smul.addr %s370, 4
          %s372 = scalar_lea.vmem %s1, %s371
        $region60: #{bis4crf_forward.1} parent=51 // pred_fallthru
          _
        // Predicated region
        $region61: #{bis4crf_forward.1} parent=51 // pred_check
          %p373 = pneg %p93
        $region62: #{bis4crf_forward.1} parent=51 // pred_check_branch
          %375 = sbr.rel (%p373) target = $region64
        $region63: #{bis4crf_forward.1} parent=51 // pred_region
          %p376 = scmp.lt.s32.totalorder %s21, 1
          %s377 = scalar_select %p376, %s21, 1
          %s378 = smul.addr %s377, 4
          %s379 = scalar_lea.vmem %s2, %s378
        $region64: #{bis4crf_forward.1} parent=51 // pred_fallthru
          _
      $region52: #{bis4crf_forward.1} parent=5 // pred_fallthru
        _
      %p380 = scmp.le.s32.totalorder 1, %s21
      %p381 = scmp.lt.s32.totalorder %s21, 3
      %p382 = pnand %p380, %p381
      %p383 = pneg %p382
      // Predicated region
      $region65: #{bis4crf_forward.1} parent=5 // pred_check
        _
      $region66: #{bis4crf_forward.1} parent=5 // pred_check_branch
        %385 = sbr.rel (%p382) target = $region68
      $region67: #{bis4crf_forward.1} parent=5 // pred_region
        %s386 = ssub.s32 %s21, 1
        %p387 = scmp.lt.s32.totalorder %s26, 1
        %s388 = scalar_select %p387, %s26, 1
        %s389 = scalar_lea.vmem %s0, %s388
        %p390 = pneg %p47
        %p391 = pneg %p44
        %p392 = scmp.lt.s32.totalorder %s26, 1
        %s393 = scalar_select %p392, %s26, 1
        %s394 = smul.addr %s393, 4
        %s395 = scalar_lea.vmem %s1, %s394
        %p396 = pneg %p73
        %p397 = pneg %p70
        %p398 = scmp.lt.s32.totalorder %s26, 1
        %s399 = scalar_select %p398, %s26, 1
        %s400 = smul.addr %s399, 4
        %s401 = scalar_lea.vmem %s2, %s400
        %p402 = pneg %p99
        %p403 = pneg %p96
        %p404 = pneg %p120
        %p405 = pneg %p117
        %p406 = pneg %p141
        %p407 = pneg %p138
        %p408 = pneg %p162
        %p409 = pneg %p159
        %p410 = pneg %p183
        %p411 = pneg %p180
        %p412 = pneg %p204
        %p413 = pneg %p201
        %p414 = pneg %p225
        %p415 = pneg %p222
        %p416 = pneg %p246
        %p417 = pneg %p243
        %p418 = pneg %p267
        %p419 = pneg %p264
        %p420 = pneg %p288
        %p421 = pneg %p285
        %p422 = pneg %p314
        %p423 = pneg %p311
        %s424 = sand.u32 %s301, 1
        %s425 = scalar_lea.sflag [#allocation3], %s424
        %s426 = sand.u32 %s301, 1
        %s427 = scalar_lea.vmem [#allocation2], %s426
        %p428 = scmp.lt.s32.totalorder %s26, 1
        %s429 = scalar_select %p428, %s26, 1
        %s430 = scalar_lea.vmem %s0, %s429
        %p431 = scmp.lt.s32.totalorder %s26, 1
        %s432 = scalar_select %p431, %s26, 1
        %s433 = smul.addr %s432, 4
        %s434 = scalar_lea.vmem %s1, %s433
        %p435 = scmp.lt.s32.totalorder %s26, 1
        %s436 = scalar_select %p435, %s26, 1
        %s437 = smul.addr %s436, 4
        %s438 = scalar_lea.vmem %s2, %s437
        %v440 = vld [vmem:[%s438] sm:$0xf]
        %v441 = vld [vmem:[%s3] sm:$0xf]
        %v442 = vld [vmem:[%s3 + $0x4] sm:$0xf]
        %v443 = vld [vmem:[%s3 + $0x8] sm:$0xf]
        %v444 = vld [vmem:[%s3 + $0xc] sm:$0xf]
        %v445 = vld [vmem:[%s3 + $0x10] sm:$0xf]
        %v446 = vld [vmem:[%s3 + $0x14] sm:$0xf]
        %v447 = vld [vmem:[%s3 + $0x18] sm:$0xf]
        %v448 = vld [vmem:[%s3 + $0x1c] sm:$0xf]
        %v449 = vld [vmem:[%s3 + $0x20] sm:$0xf]
        %v450 = vld [vmem:[%s3 + $0x24] sm:$0xf]
        %v451 = vld [vmem:[%s3 + $0x28] sm:$0xf]
        %v452 = vld [vmem:[%s3 + $0x2c] sm:$0xf]
        %v453 = vld [vmem:[%s3 + $0x30] sm:$0xf]
        %v454 = vld [vmem:[%s3 + $0x34] sm:$0xf]
        %v455 = vld [vmem:[%s3 + $0x38] sm:$0xf]
        %v471 = vunpack.c.l.b16 %v441
        %v472 = vunpack.c.l.b16 %v442
        %v473 = vunpack.c.l.b16 %v443
        %v474 = vunpack.c.l.b16 %v444
        %v475 = vunpack.c.l.b16 %v445
        %v476 = vunpack.c.l.b16 %v446
        %v477 = vunpack.c.l.b16 %v447
        %v478 = vunpack.c.l.b16 %v448
        %v479 = vunpack.c.l.b16 %v449
        %v480 = vunpack.c.l.b16 %v450
        %v481 = vunpack.c.l.b16 %v451
        %v482 = vunpack.c.l.b16 %v452
        %v483 = vunpack.c.l.b16 %v453
        %v484 = vunpack.c.l.b16 %v454
        %v485 = vunpack.c.l.b16 %v455
        %v486 = vpack.c.b16 %v472, %v471
        %v487 = vpack.c.b16 %v474, %v473
        %v488 = vpack.c.b16 %v476, %v475
        %v489 = vpack.c.b16 %v478, %v477
        %v490 = vpack.c.b16 %v480, %v479
        %v491 = vpack.c.b16 %v482, %v481
        %v492 = vpack.c.b16 %v484, %v483
        %v493 = vpack.c.b16 %v485, %v485
        %vm501 = vcmask 982016
        %v503 = vsel %vm501, %v440, 0
        %vm505 = vcmask 1043456
        %v507 = vsel %vm505, %v493, 0
        %509 = vmatprep.subr.bf16.mxu0 0
        %510 = vmatpush1.bf16.msra.mxu0 %v486
        %511 = vmatprep.subr.bf16.mxu0 0
        %512 = vmatpush1.bf16.msra.mxu0 %v487
        %513 = vmatprep.subr.bf16.mxu0 0
        %514 = vmatpush1.bf16.msra.mxu0 %v488
        %515 = vmatprep.subr.bf16.mxu0 0
        %516 = vmatpush1.bf16.msra.mxu0 %v489
        %517 = vmatprep.subr.bf16.mxu0 0
        %518 = vmatpush1.bf16.msra.mxu0 %v490
        %519 = vmatprep.subr.bf16.mxu0 0
        %520 = vmatpush1.bf16.msra.mxu0 %v491
        %521 = vmatprep.subr.bf16.mxu0 0
        %522 = vmatpush1.bf16.msra.mxu0 %v492
        %523 = vmatprep.subr.bf16.mxu0 0
        %524 = vmatpush1.bf16.msra.mxu0 %v507
        %525 = vmatprep.subr.bf16.mxu0 0
        %526 = vmatpush1.bf16.msra.mxu0 0
        %527 = vmatprep.subr.bf16.mxu0 0
        %528 = vmatpush1.bf16.msra.mxu0 0
        %529 = vmatprep.subr.bf16.mxu0 0
        %530 = vmatpush1.bf16.msra.mxu0 0
        %531 = vmatprep.subr.bf16.mxu0 0
        %532 = vmatpush1.bf16.msra.mxu0 0
        %533 = vmatprep.subr.bf16.mxu0 0
        %534 = vmatpush1.bf16.msra.mxu0 0
        %535 = vmatprep.subr.bf16.mxu0 0
        %536 = vmatpush1.bf16.msra.mxu0 0
        %537 = vmatprep.subr.bf16.mxu0 0
        %538 = vmatpush1.bf16.msra.mxu0 0
        %539 = vmatprep.subr.bf16.mxu0 0
        %540 = vmatpush1.bf16.msra.mxu0 0
        %541 = vmatprep.mubr.bf16.mxu0 0
        %542 = vmatmul.mubr.bf16.gmra.mrb[0].mxu0 %v503
        %v543 = vpop.f32.mrb[0].mxu0
        %v544 = vadd.f32 0.0, %v543
        %v545 = vpop.f32.mrb[0].mxu0
        %v546 = vpop.f32.mrb[0].mxu0
        %v547 = vpop.f32.mrb[0].mxu0
        %548 = vdwg.mxu0
        %550 = vrot.lane.b32.xlu0 %v544, 120
        %v551 = vpop.permute.xlu0 %550
        %v553 = vmax.f32 %v544, %v551
        %554 = vrot.lane.b32.xlu0 %v544, 112
        %v555 = vpop.permute.xlu0 %554
        %v557 = vmax.f32 %v553, %v555
        %558 = vrot.lane.b32.xlu0 %v544, 104
        %v559 = vpop.permute.xlu0 %558
        %v561 = vmax.f32 %v557, %v559
        %562 = vrot.lane.b32.xlu0 %v544, 96
        %v563 = vpop.permute.xlu0 %562
        %v565 = vmax.f32 %v561, %v563
        %566 = vrot.lane.b32.xlu0 %v544, 88
        %v567 = vpop.permute.xlu0 %566
        %v569 = vmax.f32 %v565, %v567
        %570 = vrot.lane.b32.xlu0 %v544, 80
        %v571 = vpop.permute.xlu0 %570
        %v573 = vmax.f32 %v569, %v571
        %574 = vrot.lane.b32.xlu0 %v544, 72
        %v575 = vpop.permute.xlu0 %574
        %v577 = vmax.f32 %v573, %v575
        %578 = vrot.lane.b32.xlu0 %v544, 64
        %v579 = vpop.permute.xlu0 %578
        %v581 = vmax.f32 %v577, %v579
        %582 = vrot.lane.b32.xlu0 %v544, 56
        %v583 = vpop.permute.xlu0 %582
        %v585 = vmax.f32 %v581, %v583
        %586 = vrot.lane.b32.xlu0 %v544, 48
        %v587 = vpop.permute.xlu0 %586
        %v589 = vmax.f32 %v585, %v587
        %590 = vrot.lane.b32.xlu0 %v544, 40
        %v591 = vpop.permute.xlu0 %590
        %v593 = vmax.f32 %v589, %v591
        %594 = vrot.lane.b32.xlu0 %v544, 32
        %v595 = vpop.permute.xlu0 %594
        %v597 = vmax.f32 %v593, %v595
        %598 = vrot.lane.b32.xlu0 %v544, 24
        %v599 = vpop.permute.xlu0 %598
        %v601 = vmax.f32 %v597, %v599
        %602 = vrot.lane.b32.xlu0 %v544, 16
        %v603 = vpop.permute.xlu0 %602
        %v605 = vmax.f32 %v601, %v603
        %v606 = vld [vmem:[%s4] sm:$0x1]
        %v608 = vlaneseq
        %v609 = vshrl.u32 %v608, 7
        %v610 = vsub.s32 0, %v609
        %v611 = vrot.slane %v606, %v610
        %v613 = vadd.f32 %v605, %v611
        %v614 = vld [vmem:[%s434] sm:$0xf]
        %v615 = vld [vmem:[%s5] sm:$0xf]
        %v616 = vld [vmem:[%s5 + $0x4] sm:$0xf]
        %v617 = vpack.c.bf16 %v613, %v613
        %v618 = vld [vmem:[%s6] sm:$0xf]
        %vm619 = vcmask 64512
        %v621 = vsel %vm619, %v617, 0
        %v624 = vsel %vm505, %v618, 0
        %626 = vmatprep.subr.bf16.mxu0 0
        %627 = vmatpush1.bf16.msra.mxu0 %v624
        %628 = vmatprep.subr.bf16.mxu0 0
        %629 = vmatpush1.bf16.msra.mxu0 0
        %630 = vmatprep.subr.bf16.mxu0 0
        %631 = vmatpush1.bf16.msra.mxu0 0
        %632 = vmatprep.subr.bf16.mxu0 0
        %633 = vmatpush1.bf16.msra.mxu0 0
        %634 = vmatprep.subr.bf16.mxu0 0
        %635 = vmatpush1.bf16.msra.mxu0 0
        %636 = vmatprep.subr.bf16.mxu0 0
        %637 = vmatpush1.bf16.msra.mxu0 0
        %638 = vmatprep.subr.bf16.mxu0 0
        %639 = vmatpush1.bf16.msra.mxu0 0
        %640 = vmatprep.subr.bf16.mxu0 0
        %641 = vmatpush1.bf16.msra.mxu0 0
        %642 = vmatprep.subr.bf16.mxu0 0
        %643 = vmatpush1.bf16.msra.mxu0 0
        %644 = vmatprep.subr.bf16.mxu0 0
        %645 = vmatpush1.bf16.msra.mxu0 0
        %646 = vmatprep.subr.bf16.mxu0 0
        %647 = vmatpush1.bf16.msra.mxu0 0
        %648 = vmatprep.subr.bf16.mxu0 0
        %649 = vmatpush1.bf16.msra.mxu0 0
        %650 = vmatprep.subr.bf16.mxu0 0
        %651 = vmatpush1.bf16.msra.mxu0 0
        %652 = vmatprep.subr.bf16.mxu0 0
        %653 = vmatpush1.bf16.msra.mxu0 0
        %654 = vmatprep.subr.bf16.mxu0 0
        %655 = vmatpush1.bf16.msra.mxu0 0
        %656 = vmatprep.subr.bf16.mxu0 0
        %657 = vmatpush1.bf16.msra.mxu0 0
        %658 = vmatprep.mubr.bf16.mxu0 0
        %659 = vmatmul.mubr.bf16.gmra.mrb[0].mxu0 %v621
        %v660 = vpop.f32.mrb[0].mxu0
        %v661 = vadd.f32 0.0, %v660
        %v662 = vpop.f32.mrb[0].mxu0
        %v663 = vpop.f32.mrb[0].mxu0
        %v664 = vpop.f32.mrb[0].mxu0
        %665 = vdwg.mxu0
        %v668 = vunpack.c.l.b16 %v615
        %v669 = vunpack.c.l.b16 %v616
        %v670 = vpack.c.b16 %v669, %v668
        %vm672 = vcmask 130048
        %v674 = vsel %vm672, %v614, 0
        %676 = vmatprep.subr.bf16.mxu0 0
        %677 = vmatpush1.bf16.msra.mxu0 %v670
        %678 = vmatprep.subr.bf16.mxu0 0
        %679 = vmatpush1.bf16.msra.mxu0 0
        %680 = vmatprep.subr.bf16.mxu0 0
        %681 = vmatpush1.bf16.msra.mxu0 0
        %682 = vmatprep.subr.bf16.mxu0 0
        %683 = vmatpush1.bf16.msra.mxu0 0
        %684 = vmatprep.subr.bf16.mxu0 0
        %685 = vmatpush1.bf16.msra.mxu0 0
        %686 = vmatprep.subr.bf16.mxu0 0
        %687 = vmatpush1.bf16.msra.mxu0 0
        %688 = vmatprep.subr.bf16.mxu0 0
        %689 = vmatpush1.bf16.msra.mxu0 0
        %690 = vmatprep.subr.bf16.mxu0 0
        %691 = vmatpush1.bf16.msra.mxu0 0
        %692 = vmatprep.subr.bf16.mxu0 0
        %693 = vmatpush1.bf16.msra.mxu0 0
        %694 = vmatprep.subr.bf16.mxu0 0
        %695 = vmatpush1.bf16.msra.mxu0 0
        %696 = vmatprep.subr.bf16.mxu0 0
        %697 = vmatpush1.bf16.msra.mxu0 0
        %698 = vmatprep.subr.bf16.mxu0 0
        %699 = vmatpush1.bf16.msra.mxu0 0
        %700 = vmatprep.subr.bf16.mxu0 0
        %701 = vmatpush1.bf16.msra.mxu0 0
        %702 = vmatprep.subr.bf16.mxu0 0
        %703 = vmatpush1.bf16.msra.mxu0 0
        %704 = vmatprep.subr.bf16.mxu0 0
        %705 = vmatpush1.bf16.msra.mxu0 0
        %706 = vmatprep.subr.bf16.mxu0 0
        %707 = vmatpush1.bf16.msra.mxu0 0
        %708 = vmatprep.mubr.bf16.mxu0 0
        %709 = vmatmul.mubr.bf16.gmra.mrb[0].mxu0 %v674
        %v710 = vpop.f32.mrb[0].mxu0
        %v711 = vadd.f32 %v661, %v710
        %v712 = vpop.f32.mrb[0].mxu0
        %v713 = vpop.f32.mrb[0].mxu0
        %v714 = vpop.f32.mrb[0].mxu0
        %715 = vdwg.mxu0
        %v716 = vpack.c.bf16 %v711, %v711
        %v717 = vld [vmem:[%s7] sm:$0xf]
        %v718 = vld [vmem:[%s7 + $0x4] sm:$0xf]
        %v719 = vld [vmem:[%s7 + $0x8] sm:$0xf]
        %v720 = vld [vmem:[%s7 + $0xc] sm:$0xf]
        %v725 = vunpack.c.l.b16 %v717
        %v726 = vunpack.c.l.b16 %v718
        %v727 = vunpack.c.l.b16 %v719
        %v728 = vunpack.c.l.b16 %v720
        %v729 = vpack.c.b16 %v726, %v725
        %v730 = vpack.c.b16 %v728, %v727
        %vm733 = vcmask 261120
        %v735 = vsel %vm733, %v716, 0
        %737 = vmatprep.subr.bf16.mxu0 0
        %738 = vmatpush1.bf16.msra.mxu0 %v729
        %739 = vmatprep.subr.bf16.mxu0 0
        %740 = vmatpush1.bf16.msra.mxu0 %v730
        %741 = vmatprep.subr.bf16.mxu0 0
        %742 = vmatpush1.bf16.msra.mxu0 0
        %743 = vmatprep.subr.bf16.mxu0 0
        %744 = vmatpush1.bf16.msra.mxu0 0
        %745 = vmatprep.subr.bf16.mxu0 0
        %746 = vmatpush1.bf16.msra.mxu0 0
        %747 = vmatprep.subr.bf16.mxu0 0
        %748 = vmatpush1.bf16.msra.mxu0 0
        %749 = vmatprep.subr.bf16.mxu0 0
        %750 = vmatpush1.bf16.msra.mxu0 0
        %751 = vmatprep.subr.bf16.mxu0 0
        %752 = vmatpush1.bf16.msra.mxu0 0
        %753 = vmatprep.subr.bf16.mxu0 0
        %754 = vmatpush1.bf16.msra.mxu0 0
        %755 = vmatprep.subr.bf16.mxu0 0
        %756 = vmatpush1.bf16.msra.mxu0 0
        %757 = vmatprep.subr.bf16.mxu0 0
        %758 = vmatpush1.bf16.msra.mxu0 0
        %759 = vmatprep.subr.bf16.mxu0 0
        %760 = vmatpush1.bf16.msra.mxu0 0
        %761 = vmatprep.subr.bf16.mxu0 0
        %762 = vmatpush1.bf16.msra.mxu0 0
        %763 = vmatprep.subr.bf16.mxu0 0
        %764 = vmatpush1.bf16.msra.mxu0 0
        %765 = vmatprep.subr.bf16.mxu0 0
        %766 = vmatpush1.bf16.msra.mxu0 0
        %767 = vmatprep.subr.bf16.mxu0 0
        %768 = vmatpush1.bf16.msra.mxu0 0
        %769 = vmatprep.mubr.bf16.mxu0 0
        %770 = vmatmul.mubr.bf16.gmra.mrb[0].mxu0 %v735
        %v771 = vpop.f32.mrb[0].mxu0
        %v772 = vadd.f32 0.0, %v771
        %v773 = vpop.f32.mrb[0].mxu0
        %v774 = vpop.f32.mrb[0].mxu0
        %v775 = vpop.f32.mrb[0].mxu0
        %776 = vdwg.mxu0
        %v777 = vld [vmem:[%s8] sm:$0xf]
        %v778 = vld [vmem:[%s8 + $0x4] sm:$0xf]
        %v779 = vld [vmem:[%s8 + $0x8] sm:$0xf]
        %v780 = vld [vmem:[%s8 + $0xc] sm:$0xf]
        %v785 = vunpack.c.l.b16 %v777
        %v786 = vunpack.c.l.b16 %v778
        %v787 = vunpack.c.l.b16 %v779
        %v788 = vunpack.c.l.b16 %v780
        %v789 = vpack.c.b16 %v786, %v785
        %v790 = vpack.c.b16 %v788, %v787
        %793 = vmatprep.subr.bf16.mxu0 0
        %794 = vmatpush1.bf16.msra.mxu0 %v789
        %795 = vmatprep.subr.bf16.mxu0 0
        %796 = vmatpush1.bf16.msra.mxu0 %v790
        %797 = vmatprep.subr.bf16.mxu0 0
        %798 = vmatpush1.bf16.msra.mxu0 0
        %799 = vmatprep.subr.bf16.mxu0 0
        %800 = vmatpush1.bf16.msra.mxu0 0
        %801 = vmatprep.subr.bf16.mxu0 0
        %802 = vmatpush1.bf16.msra.mxu0 0
        %803 = vmatprep.subr.bf16.mxu0 0
        %804 = vmatpush1.bf16.msra.mxu0 0
        %805 = vmatprep.subr.bf16.mxu0 0
        %806 = vmatpush1.bf16.msra.mxu0 0
        %807 = vmatprep.subr.bf16.mxu0 0
        %808 = vmatpush1.bf16.msra.mxu0 0
        %809 = vmatprep.subr.bf16.mxu0 0
        %810 = vmatpush1.bf16.msra.mxu0 0
        %811 = vmatprep.subr.bf16.mxu0 0
        %812 = vmatpush1.bf16.msra.mxu0 0
        %813 = vmatprep.subr.bf16.mxu0 0
        %814 = vmatpush1.bf16.msra.mxu0 0
        %815 = vmatprep.subr.bf16.mxu0 0
        %816 = vmatpush1.bf16.msra.mxu0 0
        %817 = vmatprep.subr.bf16.mxu0 0
        %818 = vmatpush1.bf16.msra.mxu0 0
        %819 = vmatprep.subr.bf16.mxu0 0
        %820 = vmatpush1.bf16.msra.mxu0 0
        %821 = vmatprep.subr.bf16.mxu0 0
        %822 = vmatpush1.bf16.msra.mxu0 0
        %823 = vmatprep.subr.bf16.mxu0 0
        %824 = vmatpush1.bf16.msra.mxu0 0
        %825 = vmatprep.mubr.bf16.mxu0 0
        %826 = vmatmul.mubr.bf16.gmra.mrb[0].mxu0 %v735
        %v827 = vpop.f32.mrb[0].mxu0
        %v828 = vadd.f32 0.0, %v827
        %v829 = vpop.f32.mrb[0].mxu0
        %v830 = vpop.f32.mrb[0].mxu0
        %v831 = vpop.f32.mrb[0].mxu0
        %832 = vdwg.mxu0
        %v833 = vld [vmem:[%s9] sm:$0xf]
        %v834 = vld [vmem:[%s9 + $0x4] sm:$0xf]
        %v835 = vld [vmem:[%s9 + $0x8] sm:$0xf]
        %v836 = vld [vmem:[%s9 + $0xc] sm:$0xf]
        %v841 = vunpack.c.l.b16 %v833
        %v842 = vunpack.c.l.b16 %v834
        %v843 = vunpack.c.l.b16 %v835
        %v844 = vunpack.c.l.b16 %v836
        %v845 = vpack.c.b16 %v842, %v841
        %v846 = vpack.c.b16 %v844, %v843
        %849 = vmatprep.subr.bf16.mxu0 0
        %850 = vmatpush1.bf16.msra.mxu0 %v845
        %851 = vmatprep.subr.bf16.mxu0 0
        %852 = vmatpush1.bf16.msra.mxu0 %v846
        %853 = vmatprep.subr.bf16.mxu0 0
        %854 = vmatpush1.bf16.msra.mxu0 0
        %855 = vmatprep.subr.bf16.mxu0 0
        %856 = vmatpush1.bf16.msra.mxu0 0
        %857 = vmatprep.subr.bf16.mxu0 0
        %858 = vmatpush1.bf16.msra.mxu0 0
        %859 = vmatprep.subr.bf16.mxu0 0
        %860 = vmatpush1.bf16.msra.mxu0 0
        %861 = vmatprep.subr.bf16.mxu0 0
        %862 = vmatpush1.bf16.msra.mxu0 0
        %863 = vmatprep.subr.bf16.mxu0 0
        %864 = vmatpush1.bf16.msra.mxu0 0
        %865 = vmatprep.subr.bf16.mxu0 0
        %866 = vmatpush1.bf16.msra.mxu0 0
        %867 = vmatprep.subr.bf16.mxu0 0
        %868 = vmatpush1.bf16.msra.mxu0 0
        %869 = vmatprep.subr.bf16.mxu0 0
        %870 = vmatpush1.bf16.msra.mxu0 0
        %871 = vmatprep.subr.bf16.mxu0 0
        %872 = vmatpush1.bf16.msra.mxu0 0
        %873 = vmatprep.subr.bf16.mxu0 0
        %874 = vmatpush1.bf16.msra.mxu0 0
        %875 = vmatprep.subr.bf16.mxu0 0
        %876 = vmatpush1.bf16.msra.mxu0 0
        %877 = vmatprep.subr.bf16.mxu0 0
        %878 = vmatpush1.bf16.msra.mxu0 0
        %879 = vmatprep.subr.bf16.mxu0 0
        %880 = vmatpush1.bf16.msra.mxu0 0
        %881 = vmatprep.mubr.bf16.mxu0 0
        %882 = vmatmul.mubr.bf16.gmra.mrb[0].mxu0 %v735
        %v883 = vpop.f32.mrb[0].mxu0
        %v884 = vadd.f32 0.0, %v883
        %v885 = vpop.f32.mrb[0].mxu0
        %v886 = vpop.f32.mrb[0].mxu0
        %v887 = vpop.f32.mrb[0].mxu0
        %888 = vdwg.mxu0
        %v889 = vpack.c.bf16 %v772, %v772
        %v890 = vpack.c.bf16 %v828, %v828
        %v892 = vsel %vm733, %v889, 0
        %v895 = vsel %vm733, %v890, 0
        %897 = vmatprep.subr.bf16.mxu0 0
        %898 = vmatpush1.bf16.xpose.msra.mxu0 %v895
        %899 = vmatprep.subr.bf16.mxu0 0
        %900 = vmatpush1.bf16.xpose.msra.mxu0 0
        %901 = vmatprep.subr.bf16.mxu0 0
        %902 = vmatpush1.bf16.xpose.msra.mxu0 0
        %903 = vmatprep.subr.bf16.mxu0 0
        %904 = vmatpush1.bf16.xpose.msra.mxu0 0
        %905 = vmatprep.subr.bf16.mxu0 0
        %906 = vmatpush1.bf16.xpose.msra.mxu0 0
        %907 = vmatprep.subr.bf16.mxu0 0
        %908 = vmatpush1.bf16.xpose.msra.mxu0 0
        %909 = vmatprep.subr.bf16.mxu0 0
        %910 = vmatpush1.bf16.xpose.msra.mxu0 0
        %911 = vmatprep.subr.bf16.mxu0 0
        %912 = vmatpush1.bf16.xpose.msra.mxu0 0
        %913 = vmatprep.subr.bf16.mxu0 0
        %914 = vmatpush1.bf16.xpose.msra.mxu0 0
        %915 = vmatprep.subr.bf16.mxu0 0
        %916 = vmatpush1.bf16.xpose.msra.mxu0 0
        %917 = vmatprep.subr.bf16.mxu0 0
        %918 = vmatpush1.bf16.xpose.msra.mxu0 0
        %919 = vmatprep.subr.bf16.mxu0 0
        %920 = vmatpush1.bf16.xpose.msra.mxu0 0
        %921 = vmatprep.subr.bf16.mxu0 0
        %922 = vmatpush1.bf16.xpose.msra.mxu0 0
        %923 = vmatprep.subr.bf16.mxu0 0
        %924 = vmatpush1.bf16.xpose.msra.mxu0 0
        %925 = vmatprep.subr.bf16.mxu0 0
        %926 = vmatpush1.bf16.xpose.msra.mxu0 0
        %927 = vmatprep.subr.bf16.mxu0 0
        %928 = vmatpush1.bf16.xpose.msra.mxu0 0
        %929 = vmatprep.mubr.bf16.mxu0 0
        %930 = vmatmul.mubr.bf16.gmra.mrb[0].mxu0 %v892
        %v931 = vpop.f32.mrb[0].mxu0
        %v932 = vadd.f32 0.0, %v931
        %v933 = vpop.f32.mrb[0].mxu0
        %v934 = vpop.f32.mrb[0].mxu0
        %v935 = vpop.f32.mrb[0].mxu0
        %936 = vdwg.mxu0
        %v937 = vld [vmem:[%s430] sm:$0x1]
        %vm938 = vcmp.ne.s32.totalorder %v937, 0
        %v939 = vsel %vm938, 1, 0
        %v940 = vlaneseq
        %v941 = vshrl.u32 %v940, 7
        %v942 = vsub.s32 0, %v941
        %v943 = vrot.slane %v939, %v942
        %vm944 = vcmp.eq.s32.totalorder %v943, 1
        %v945 = vsel %vm944, %v932, -1e+30
        %v946 = vsel %vm619, %v945, -inf
        %947 = vmax.xlane.f32.xlu0 %v946
        %v948 = vpop.xlane.xlu0 %947
        %v949 = vsub.f32 %v945, %v948
        %v950 = vmul.f32 %v949, 1.442695
        %v951 = vpow.pop %v950
        %v952 = vsel %vm619, %v951, 0.0
        %953 = vadd.xlane.f32.xlu0 %v952
        %v954 = vpop.xlane.xlu0 %953
        %v955 = vrcp.pop %v954
        %v956 = vmul.f32 %v951, %v955
        %v957 = vpack.c.bf16 %v956, %v956
        %v958 = vpack.c.bf16 %v884, %v884
        %v960 = vsel %vm619, %v957, 0
        %v963 = vsel %vm505, %v958, 0
        %965 = vmatprep.subr.bf16.mxu0 0
        %966 = vmatpush1.bf16.msra.mxu0 %v963
        %967 = vmatprep.subr.bf16.mxu0 0
        %968 = vmatpush1.bf16.msra.mxu0 0
        %969 = vmatprep.subr.bf16.mxu0 0
        %970 = vmatpush1.bf16.msra.mxu0 0
        %971 = vmatprep.subr.bf16.mxu0 0
        %972 = vmatpush1.bf16.msra.mxu0 0
        %973 = vmatprep.subr.bf16.mxu0 0
        %974 = vmatpush1.bf16.msra.mxu0 0
        %975 = vmatprep.subr.bf16.mxu0 0
        %976 = vmatpush1.bf16.msra.mxu0 0
        %977 = vmatprep.subr.bf16.mxu0 0
        %978 = vmatpush1.bf16.msra.mxu0 0
        %979 = vmatprep.subr.bf16.mxu0 0
        %980 = vmatpush1.bf16.msra.mxu0 0
        %981 = vmatprep.subr.bf16.mxu0 0
        %982 = vmatpush1.bf16.msra.mxu0 0
        %983 = vmatprep.subr.bf16.mxu0 0
        %984 = vmatpush1.bf16.msra.mxu0 0
        %985 = vmatprep.subr.bf16.mxu0 0
        %986 = vmatpush1.bf16.msra.mxu0 0
        %987 = vmatprep.subr.bf16.mxu0 0
        %988 = vmatpush1.bf16.msra.mxu0 0
        %989 = vmatprep.subr.bf16.mxu0 0
        %990 = vmatpush1.bf16.msra.mxu0 0
        %991 = vmatprep.subr.bf16.mxu0 0
        %992 = vmatpush1.bf16.msra.mxu0 0
        %993 = vmatprep.subr.bf16.mxu0 0
        %994 = vmatpush1.bf16.msra.mxu0 0
        %995 = vmatprep.subr.bf16.mxu0 0
        %996 = vmatpush1.bf16.msra.mxu0 0
        %997 = vmatprep.mubr.bf16.mxu0 0
        %998 = vmatmul.mubr.bf16.gmra.mrb[0].mxu0 %v960
        %v999 = vpop.f32.mrb[0].mxu0
        %v1000 = vadd.f32 0.0, %v999
        %v1001 = vpop.f32.mrb[0].mxu0
        %v1002 = vpop.f32.mrb[0].mxu0
        %v1003 = vpop.f32.mrb[0].mxu0
        %1004 = vdwg.mxu0
        %v1005 = vpack.c.bf16 %v1000, %v1000
        %v1006 = vld [vmem:[%s10] sm:$0xf]
        %v1007 = vld [vmem:[%s10 + $0x4] sm:$0xf]
        %v1008 = vld [vmem:[%s10 + $0x8] sm:$0xf]
        %v1009 = vld [vmem:[%s10 + $0xc] sm:$0xf]
        %v1010 = vld [vmem:[%s11] sm:$0x1]
        %v1012 = vlaneseq
        %v1013 = vshrl.u32 %v1012, 7
        %v1014 = vsub.s32 0, %v1013
        %v1015 = vrot.slane %v1010, %v1014
        %v1021 = vunpack.c.l.b16 %v1006
        %v1022 = vunpack.c.l.b16 %v1007
        %v1023 = vunpack.c.l.b16 %v1008
        %v1024 = vunpack.c.l.b16 %v1009
        %v1025 = vpack.c.b16 %v1022, %v1021
        %v1026 = vpack.c.b16 %v1024, %v1023
        %v1030 = vsel %vm733, %v1005, 0
        %1032 = vmatprep.subr.bf16.mxu0 0
        %1033 = vmatpush1.bf16.msra.mxu0 %v1025
        %1034 = vmatprep.subr.bf16.mxu0 0
        %1035 = vmatpush1.bf16.msra.mxu0 %v1026
        %1036 = vmatprep.subr.bf16.mxu0 0
        %1037 = vmatpush1.bf16.msra.mxu0 0
        %1038 = vmatprep.subr.bf16.mxu0 0
        %1039 = vmatpush1.bf16.msra.mxu0 0
        %1040 = vmatprep.subr.bf16.mxu0 0
        %1041 = vmatpush1.bf16.msra.mxu0 0
        %1042 = vmatprep.subr.bf16.mxu0 0
        %1043 = vmatpush1.bf16.msra.mxu0 0
        %1044 = vmatprep.subr.bf16.mxu0 0
        %1045 = vmatpush1.bf16.msra.mxu0 0
        %1046 = vmatprep.subr.bf16.mxu0 0
        %1047 = vmatpush1.bf16.msra.mxu0 0
        %1048 = vmatprep.subr.bf16.mxu0 0
        %1049 = vmatpush1.bf16.msra.mxu0 0
        %1050 = vmatprep.subr.bf16.mxu0 0
        %1051 = vmatpush1.bf16.msra.mxu0 0
        %1052 = vmatprep.subr.bf16.mxu0 0
        %1053 = vmatpush1.bf16.msra.mxu0 0
        %1054 = vmatprep.subr.bf16.mxu0 0
        %1055 = vmatpush1.bf16.msra.mxu0 0
        %1056 = vmatprep.subr.bf16.mxu0 0
        %1057 = vmatpush1.bf16.msra.mxu0 0
        %1058 = vmatprep.subr.bf16.mxu0 0
        %1059 = vmatpush1.bf16.msra.mxu0 0
        %1060 = vmatprep.subr.bf16.mxu0 0
        %1061 = vmatpush1.bf16.msra.mxu0 0
        %1062 = vmatprep.subr.bf16.mxu0 0
        %1063 = vmatpush1.bf16.msra.mxu0 0
        %1064 = vmatprep.mubr.bf16.mxu0 0
        %1065 = vmatmul.mubr.bf16.gmra.mrb[0].mxu0 %v1030
        %v1066 = vpop.f32.mrb[0].mxu0
        %v1067 = vadd.f32 %v1015, %v1066
        %v1068 = vpop.f32.mrb[0].mxu0
        %v1069 = vpop.f32.mrb[0].mxu0
        %v1070 = vpop.f32.mrb[0].mxu0
        %1071 = vdwg.mxu0
        %vm1072 = vcmask 80896
        %v1073 = vsel %vm1072, %v1067, -inf
        %1074 = vmax.xlane.f32.xlu0 %v1073
        %v1075 = vpop.xlane.xlu0 %1074
        %v1076 = vlaneseq
        %v1077 = vand.u32 %v1076, 127
        %v1078 = vcvt.s32.f32 %v1077
        %vm1079 = vcmp.eq.f32.partialorder %v1067, %v1075
        %v1080 = vsel %vm1079, %v1078, 10.0
        %v1081 = vsel %vm1072, %v1080, inf
        %1082 = vmin.xlane.f32.xlu0 %v1081
        %v1083 = vpop.xlane.xlu0 %1082
        %v1084 = vcvt.f32.s32.to.zero.pseudo %v1083
        %v1085 = vlaneseq
        %v1086 = vshrl.u32 %v1085, 7
        %v1087 = vsub.s32 %v1077, %v1086
        %v1088 = vrot.slane %v1084, %v1087
        %vm1089 = vcmask 57344
        %1090 = vst.msk [vmem:[%s427] sm:$0x1] %vm1089, %v1088
        %s1091 = sand.u32 %s301, 1
        %s1092 = scalar_lea.sflag [#allocation3], %s1091
        %s1093 = sand.u32 %s301, 1
        %s1094 = scalar_lea.vmem [#allocation2], %s1093
        // Predicated region
        $region69: #{bis4crf_forward.1} parent=67 // pred_check
          %p1095 = pneg %p311
        $region70: #{bis4crf_forward.1} parent=67 // pred_check_branch
          %1097 = sbr.rel (%p1095) target = $region72
        $region71: #{bis4crf_forward.1} parent=67 // pred_region
          %s1099 = ssub.s32 16, 16
          %1100 = vsyncadd %s1092, %s1099
          %s1101 = smul.addr %s26, 16
          %s1102 = scalar_lea.hbm %s12, %s1101
          %s1104 = sshll.u32 %s1094, 4
          %s1105 = int_to_ptr.vmem [resolvable:$true] %s1104
          %1107 = dma.vmem_to_hbm [thread:$0]  %s1105, 16, %s1102, %s1092
        $region72: #{bis4crf_forward.1} parent=67 // pred_fallthru
          _
      $region68: #{bis4crf_forward.1} parent=5 // pred_fallthru
        _
      %p1108 = scmp.le.s32.totalorder 2, %s21
      // Predicated region
      $region73: #{bis4crf_forward.1} parent=5 // pred_check
        %p1109 = pneg %p1108
      $region74: #{bis4crf_forward.1} parent=5 // pred_check_branch
        %1111 = sbr.rel (%p1109) target = $region76
      $region75: #{bis4crf_forward.1} parent=5 // pred_region
        %s1112 = ssub.s32 %s21, 2
        // Predicated region
        $region77: #{bis4crf_forward.1} parent=75 // pred_check
          %p1113 = pneg %p317
        $region78: #{bis4crf_forward.1} parent=75 // pred_check_branch
          %1115 = sbr.rel (%p1113) target = $region80
        $region79: #{bis4crf_forward.1} parent=75 // pred_region
          %s1116 = sand.u32 %s302, 1
          %s1117 = scalar_lea.sflag [#allocation3], %s1116
          %s1118 = sand.u32 %s302, 1
          %s1119 = scalar_lea.vmem [#allocation2], %s1118
          %1120 = dma.done %s1117, 16
        $region80: #{bis4crf_forward.1} parent=75 // pred_fallthru
          _
      $region76: #{bis4crf_forward.1} parent=5 // pred_fallthru
        _
    $region6: #{bis4crf_forward.1} parent=1 // loop_footer
      %s25 = sadd.s32 1, %s21
    $region7: #{bis4crf_forward.1} parent=1 // loop_footer_branch
      %20 = sbr.rel target = $region3
    $region8: #{bis4crf_forward.1} parent=1 // loop_exit
      _
    %1121 = vsyncpa [#allocation3], 1
    %s1122 = scalar_lea.sflag [#allocation3], 1
    %1123 = vsyncpa %s1122, 1

</llo_original>
